<compile_context>
chip_gen: v5e
topology: v5e:2x2
jax: 0.10.0
libtpu: 0.0.40
codegen_flags: <defaults>
</compile_context>

<pallas_src>
import functools

import jax
import jax.numpy as jnp
from jax import lax
from jax.experimental import pallas as pl
from jax.experimental.pallas import tpu as pltpu


def _round_up(x, m):
    return ((x + m - 1) // m) * m


def _gsympnet_kernel(pqh_ref, K_ref, Kh_ref, a2_ref, bh_ref, out_ref, *,
                     layers, d, has_h, steps):
    x = pqh_ref[...]                       # (F, TILE_N), batch on lanes
    p = x[0:d, :]                          # (d, TILE_N)
    q = x[d:2 * d, :]                      # (d, TILE_N)
    h = x[2 * d:2 * d + 1, :] if has_h else None   # (1, TILE_N)

    def one_pass(p, q):
        for i in range(layers):
            K = K_ref[i]                   # (d, W)      original K
            Kh = Kh_ref[i]                 # (W, d)      0.5 * K.T
            a2 = a2_ref[i]                 # (W, 1)      0.5 * a
            bh = bh_ref[i]                 # (W, 1)      0.5 * b
            src = q if i % 2 == 0 else p   # even -> 'up', odd -> 'low'

            # zh = 0.5 * (src^T @ K + b)^T  in (W, TILE_N) layout.
            if d <= 32:
                # VPU path: d broadcast-FMAs (contraction dim is tiny).
                zh = bh + Kh[:, 0:1] * src[0:1, :]
                for c in range(1, d):
                    zh = zh + Kh[:, c:c + 1] * src[c:c + 1, :]
            else:
                zh = lax.dot_general(Kh, src, (((1,), (0,)), ((), ())),
                                     preferred_element_type=jnp.float32) + bh

            # t = sigmoid(z) * a  ==  a2 * tanh(z/2) + a2   (one EUP push/elem)
            t = a2 * jnp.tanh(zh) + a2                      # (W, TILE_N)

            # gradH = (t^T @ K.T)^T = K @ t : single fused contraction over W.
            gradH = lax.dot_general(K, t, (((1,), (0,)), ((), ())),
                                    preferred_element_type=jnp.float32)
            if has_h:
                gradH = gradH * h
            if i % 2 == 0:
                p = p + gradH
            else:
                q = q + gradH
        return p, q

    if steps <= 4:
        for _ in range(steps):
            p, q = one_pass(p, q)
    else:
        p, q = lax.fori_loop(0, steps, lambda _, pq: one_pass(*pq), (p, q))

    out_ref[...] = jnp.concatenate([p, q], axis=0)          # (dim, TILE_N)


def gsympnet_forward(pqh, K, a, b, *, dim, steps=1, tile_n=4096):
    """pqh: [N, dim] or [N, dim+1]; K: [L, d, W]; a, b: [L, 1, W].

    steps=1 reproduces GSympNet.forward; steps>1 applies the full layer stack
    `steps` times in one kernel launch and returns the final state.
    """
    d = dim // 2
    N, F = pqh.shape
    L, _, W = K.shape

    if F == dim + 1:
        has_h = True
    elif F == dim:
        has_h = False
    else:
        raise ValueError("bad trailing dim")

    f32 = jnp.float32
    pqh = pqh.astype(f32)
    K = K.astype(f32)                                  # (L, d, W)

    # Pre-scaled / pre-transposed per-layer constants (fold the tanh 1/2).
    Kh = 0.5 * jnp.swapaxes(K, 1, 2)                   # (L, W, d) = K.T / 2
    a2 = 0.5 * jnp.swapaxes(a.astype(f32), 1, 2)       # (L, W, 1) = a / 2
    bh = 0.5 * jnp.swapaxes(b.astype(f32), 1, 2)       # (L, W, 1) = b / 2

    # Batch-on-lanes layout: [F, N].
    x_t = pqh.T

    # Tile sizing: lane multiples of 128; prefer >= 2 grid steps (v7x has two
    # TensorCores); cap for sanity (per-tile VMEM here is tiny either way).
    n128 = max(128, _round_up(N, 128))
    tile_n = max(128, min(_round_up(int(tile_n), 128), n128, 16384))
    if n128 // tile_n < 2 and n128 >= 256:
        tile_n = _round_up(pl.cdiv(n128, 2), 128)
    n_pad = _round_up(n128, tile_n)
    if n_pad != N:
        # Padded batch columns run through all layers and are sliced off; the
        # extra work is negligible at these widths.
        x_t = jnp.pad(x_t, ((0, 0), (0, n_pad - N)))

    kernel = functools.partial(_gsympnet_kernel, layers=L, d=d,
                               has_h=has_h, steps=int(steps))

    out_t = pl.pallas_call(
        kernel,
        out_shape=jax.ShapeDtypeStruct((dim, n_pad), f32),
        grid=(n_pad // tile_n,),
        in_specs=[
            pl.BlockSpec((F, tile_n), lambda i: (0, i)),     # pqh tile
            pl.BlockSpec((L, d, W), lambda i: (0, 0, 0)),    # K   (resident)
            pl.BlockSpec((L, W, d), lambda i: (0, 0, 0)),    # K.T/2
            pl.BlockSpec((L, W, 1), lambda i: (0, 0, 0)),    # a/2
            pl.BlockSpec((L, W, 1), lambda i: (0, 0, 0)),    # b/2
        ],
        out_specs=pl.BlockSpec((dim, tile_n), lambda i: (0, i)),
        compiler_params=pltpu.CompilerParams(
            dimension_semantics=("parallel",)),
    )(x_t, K, Kh, a2, bh)

    return out_t.T[:N]


def _reference_forward(pqh, K, a, b, *, dim, steps=1):
    d = dim // 2
    if pqh.shape[-1] == dim + 1:
        p, q, h = pqh[..., :d], pqh[..., d:-1], pqh[..., -1:]
    else:
        p, q = pqh[..., :d], pqh[..., d:]
        h = jnp.ones_like(pqh[..., -1:])
    for _ in range(steps):
        for i in range(K.shape[0]):
            Ki, ai, bi = K[i], a[i], b[i]
            if i % 2 == 0:
                gradH = (jax.nn.sigmoid(q @ Ki + bi) * ai) @ Ki.T
                p = p + gradH * h
            else:
                gradH = (jax.nn.sigmoid(p @ Ki + bi) * ai) @ Ki.T
                q = q + gradH * h
    return jnp.concatenate([p, q], axis=-1)


if __name__ == "__main__":
    # GSympNet(dim=4, layers=3, width=20, activation='sigmoid')
    dim, layers, width = 4, 3, 20
    d = dim // 2
    num = 8

    key = jax.random.PRNGKey(0)
    k_x, k_K, k_a, k_x2 = jax.random.split(key, 4)

    # input with trailing time-step column h: [num, dim + 1]
    pqh = jax.random.normal(k_x, (num, dim + 1), dtype=jnp.float32)

    # deterministic parameter init matching GradientModule.__init_params
    K = jax.random.normal(k_K, (layers, d, width), dtype=jnp.float32) * 0.01
    a = jax.random.normal(k_a, (layers, 1, width), dtype=jnp.float32) * 0.01
    b = jnp.zeros((layers, 1, width), dtype=jnp.float32)

    # 1) plain forward ([num, dim+1] input)
    out = jax.block_until_ready(gsympnet_forward(pqh, K, a, b, dim=dim))
    ref = _reference_forward(pqh, K, a, b, dim=dim)
    assert out.shape == (num, dim)
    assert jnp.allclose(out, ref, atol=2e-5, rtol=2e-5)

    # 2) [num, dim] input variant (h defaults to ones)
    out_noh = jax.block_until_ready(
        gsympnet_forward(pqh[:, :dim], K, a, b, dim=dim))
    ref_noh = _reference_forward(pqh[:, :dim], K, a, b, dim=dim)
    assert jnp.allclose(out_noh, ref_noh, atol=2e-5, rtol=2e-5)

    # 3) multi-tile batch (exercises padding + >=2 grid steps)
    pqh_big = jax.random.normal(k_x2, (300, dim + 1), dtype=jnp.float32)
    out_big = jax.block_until_ready(gsympnet_forward(pqh_big, K, a, b, dim=dim))
    ref_big = _reference_forward(pqh_big, K, a, b, dim=dim)
    assert jnp.allclose(out_big, ref_big, atol=2e-5, rtol=2e-5)

    # 4) multi-step, unrolled path (steps <= 4)
    out_ms = jax.block_until_ready(
        gsympnet_forward(pqh, K, a, b, dim=dim, steps=4))
    ref_ms = _reference_forward(pqh, K, a, b, dim=dim, steps=4)
    assert jnp.allclose(out_ms, ref_ms, atol=1e-4, rtol=1e-4)

    # 5) multi-step, fori_loop path (steps > 4)
    out_ms6 = jax.block_until_ready(
        gsympnet_forward(pqh, K, a, b, dim=dim, steps=6))
    ref_ms6 = _reference_forward(pqh, K, a, b, dim=dim, steps=6)
    assert jnp.allclose(out_ms6, ref_ms6, atol=1e-4, rtol=1e-4)

    print("KERNEL_OK")
</pallas_src>

<mosaic_0001>
module attributes {stable_mosaic.version = 11 : i64} {
  func.func @_gsympnet_kernel(%arg0: i32, %arg1: memref<5x128xf32, #tpu.memory_space<vmem>>, %arg2: memref<3x2x20xf32, #tpu.memory_space<vmem>>, %arg3: memref<3x20x2xf32, #tpu.memory_space<vmem>>, %arg4: memref<3x20x1xf32, #tpu.memory_space<vmem>>, %arg5: memref<3x20x1xf32, #tpu.memory_space<vmem>>, %arg6: memref<4x128xf32, #tpu.memory_space<vmem>>) attributes {dimension_semantics = [#tpu.dimension_semantics<parallel>], iteration_bounds = array<i64: 1>, scalar_prefetch = 0 : i64, scratch_operands = 0 : i64, tpu.core_type = #tpu.core_type<tc>, window_params = [{transform_indices = @transform_0, window_bounds = array<i64: 5, 128>}, {pipeline_mode = #tpu.pipeline_mode<synchronous>, transform_indices = @transform_1, window_bounds = array<i64: 3, 2, 20>}, {pipeline_mode = #tpu.pipeline_mode<synchronous>, transform_indices = @transform_2, window_bounds = array<i64: 3, 20, 2>}, {pipeline_mode = #tpu.pipeline_mode<synchronous>, transform_indices = @transform_3, window_bounds = array<i64: 3, 20, 1>}, {pipeline_mode = #tpu.pipeline_mode<synchronous>, transform_indices = @transform_4, window_bounds = array<i64: 3, 20, 1>}, {transform_indices = @transform_5, window_bounds = array<i64: 4, 128>}]} {
    %c0 = arith.constant 0 : index
    %c0_0 = arith.constant 0 : index
    %0 = vector.load %arg1[%c0, %c0_0] : memref<5x128xf32, #tpu.memory_space<vmem>>, vector<5x128xf32>
    %1 = vector.extract_strided_slice %0 {offsets = [0, 0], sizes = [2, 128], strides = [1, 1]} : vector<5x128xf32> to vector<2x128xf32>
    %2 = vector.extract_strided_slice %0 {offsets = [2, 0], sizes = [2, 128], strides = [1, 1]} : vector<5x128xf32> to vector<2x128xf32>
    %3 = vector.extract_strided_slice %0 {offsets = [4, 0], sizes = [1, 128], strides = [1, 1]} : vector<5x128xf32> to vector<1x128xf32>
    %c0_1 = arith.constant 0 : index
    %c0_2 = arith.constant 0 : index
    %c0_3 = arith.constant 0 : index
    %4 = vector.load %arg2[%c0_1, %c0_2, %c0_3] : memref<3x2x20xf32, #tpu.memory_space<vmem>>, vector<1x2x20xf32>
    %5 = vector.shape_cast %4 : vector<1x2x20xf32> to vector<2x20xf32>
    %c0_4 = arith.constant 0 : index
    %c0_5 = arith.constant 0 : index
    %c0_6 = arith.constant 0 : index
    %6 = vector.load %arg3[%c0_4, %c0_5, %c0_6] : memref<3x20x2xf32, #tpu.memory_space<vmem>>, vector<1x20x2xf32>
    %7 = vector.shape_cast %6 : vector<1x20x2xf32> to vector<20x2xf32>
    %c0_7 = arith.constant 0 : index
    %c0_8 = arith.constant 0 : index
    %c0_9 = arith.constant 0 : index
    %8 = vector.load %arg4[%c0_7, %c0_8, %c0_9] : memref<3x20x1xf32, #tpu.memory_space<vmem>>, vector<1x20x1xf32>
    %9 = vector.shape_cast %8 : vector<1x20x1xf32> to vector<20x1xf32>
    %c0_10 = arith.constant 0 : index
    %c0_11 = arith.constant 0 : index
    %c0_12 = arith.constant 0 : index
    %10 = vector.load %arg5[%c0_10, %c0_11, %c0_12] : memref<3x20x1xf32, #tpu.memory_space<vmem>>, vector<1x20x1xf32>
    %11 = vector.shape_cast %10 : vector<1x20x1xf32> to vector<20x1xf32>
    %12 = vector.extract_strided_slice %7 {offsets = [0, 0], sizes = [20, 1], strides = [1, 1]} : vector<20x2xf32> to vector<20x1xf32>
    %13 = vector.extract_strided_slice %2 {offsets = [0, 0], sizes = [1, 128], strides = [1, 1]} : vector<2x128xf32> to vector<1x128xf32>
    %14 = vector.broadcast %12 : vector<20x1xf32> to vector<20x128xf32>
    %15 = vector.broadcast %13 : vector<1x128xf32> to vector<20x128xf32>
    %16 = arith.mulf %14, %15 : vector<20x128xf32>
    %17 = vector.broadcast %11 : vector<20x1xf32> to vector<20x128xf32>
    %18 = arith.addf %17, %16 : vector<20x128xf32>
    %19 = vector.extract_strided_slice %7 {offsets = [0, 1], sizes = [20, 1], strides = [1, 1]} : vector<20x2xf32> to vector<20x1xf32>
    %20 = vector.extract_strided_slice %2 {offsets = [1, 0], sizes = [1, 128], strides = [1, 1]} : vector<2x128xf32> to vector<1x128xf32>
    %21 = vector.broadcast %19 : vector<20x1xf32> to vector<20x128xf32>
    %22 = vector.broadcast %20 : vector<1x128xf32> to vector<20x128xf32>
    %23 = arith.mulf %21, %22 : vector<20x128xf32>
    %24 = arith.addf %18, %23 : vector<20x128xf32>
    %25 = math.tanh %24 : vector<20x128xf32>
    %26 = vector.broadcast %9 : vector<20x1xf32> to vector<20x128xf32>
    %27 = arith.mulf %26, %25 : vector<20x128xf32>
    %28 = vector.broadcast %9 : vector<20x1xf32> to vector<20x128xf32>
    %29 = arith.addf %27, %28 : vector<20x128xf32>
    %cst = arith.constant dense<0.000000e+00> : vector<2x128xf32>
    %30 = tpu.matmul %5, %29, %cst {dimension_numbers = #tpu.dot_dimension_numbers<[1], [0], [0], [1], [0, 0, 1, 1], [], []>} : vector<2x20xf32>, vector<20x128xf32>, vector<2x128xf32> -> vector<2x128xf32>
    %31 = vector.broadcast %3 : vector<1x128xf32> to vector<2x128xf32>
    %32 = arith.mulf %30, %31 : vector<2x128xf32>
    %33 = arith.addf %1, %32 : vector<2x128xf32>
    %c1 = arith.constant 1 : index
    %c0_13 = arith.constant 0 : index
    %c0_14 = arith.constant 0 : index
    %34 = vector.load %arg2[%c1, %c0_13, %c0_14] : memref<3x2x20xf32, #tpu.memory_space<vmem>>, vector<1x2x20xf32>
    %35 = vector.shape_cast %34 : vector<1x2x20xf32> to vector<2x20xf32>
    %c1_15 = arith.constant 1 : index
    %c0_16 = arith.constant 0 : index
    %c0_17 = arith.constant 0 : index
    %36 = vector.load %arg3[%c1_15, %c0_16, %c0_17] : memref<3x20x2xf32, #tpu.memory_space<vmem>>, vector<1x20x2xf32>
    %37 = vector.shape_cast %36 : vector<1x20x2xf32> to vector<20x2xf32>
    %c1_18 = arith.constant 1 : index
    %c0_19 = arith.constant 0 : index
    %c0_20 = arith.constant 0 : index
    %38 = vector.load %arg4[%c1_18, %c0_19, %c0_20] : memref<3x20x1xf32, #tpu.memory_space<vmem>>, vector<1x20x1xf32>
    %39 = vector.shape_cast %38 : vector<1x20x1xf32> to vector<20x1xf32>
    %c1_21 = arith.constant 1 : index
    %c0_22 = arith.constant 0 : index
    %c0_23 = arith.constant 0 : index
    %40 = vector.load %arg5[%c1_21, %c0_22, %c0_23] : memref<3x20x1xf32, #tpu.memory_space<vmem>>, vector<1x20x1xf32>
    %41 = vector.shape_cast %40 : vector<1x20x1xf32> to vector<20x1xf32>
    %42 = vector.extract_strided_slice %37 {offsets = [0, 0], sizes = [20, 1], strides = [1, 1]} : vector<20x2xf32> to vector<20x1xf32>
    %43 = vector.extract_strided_slice %33 {offsets = [0, 0], sizes = [1, 128], strides = [1, 1]} : vector<2x128xf32> to vector<1x128xf32>
    %44 = vector.broadcast %42 : vector<20x1xf32> to vector<20x128xf32>
    %45 = vector.broadcast %43 : vector<1x128xf32> to vector<20x128xf32>
    %46 = arith.mulf %44, %45 : vector<20x128xf32>
    %47 = vector.broadcast %41 : vector<20x1xf32> to vector<20x128xf32>
    %48 = arith.addf %47, %46 : vector<20x128xf32>
    %49 = vector.extract_strided_slice %37 {offsets = [0, 1], sizes = [20, 1], strides = [1, 1]} : vector<20x2xf32> to vector<20x1xf32>
    %50 = vector.extract_strided_slice %33 {offsets = [1, 0], sizes = [1, 128], strides = [1, 1]} : vector<2x128xf32> to vector<1x128xf32>
    %51 = vector.broadcast %49 : vector<20x1xf32> to vector<20x128xf32>
    %52 = vector.broadcast %50 : vector<1x128xf32> to vector<20x128xf32>
    %53 = arith.mulf %51, %52 : vector<20x128xf32>
    %54 = arith.addf %48, %53 : vector<20x128xf32>
    %55 = math.tanh %54 : vector<20x128xf32>
    %56 = vector.broadcast %39 : vector<20x1xf32> to vector<20x128xf32>
    %57 = arith.mulf %56, %55 : vector<20x128xf32>
    %58 = vector.broadcast %39 : vector<20x1xf32> to vector<20x128xf32>
    %59 = arith.addf %57, %58 : vector<20x128xf32>
    %cst_24 = arith.constant dense<0.000000e+00> : vector<2x128xf32>
    %60 = tpu.matmul %35, %59, %cst_24 {dimension_numbers = #tpu.dot_dimension_numbers<[1], [0], [0], [1], [0, 0, 1, 1], [], []>} : vector<2x20xf32>, vector<20x128xf32>, vector<2x128xf32> -> vector<2x128xf32>
    %61 = vector.broadcast %3 : vector<1x128xf32> to vector<2x128xf32>
    %62 = arith.mulf %60, %61 : vector<2x128xf32>
    %63 = arith.addf %2, %62 : vector<2x128xf32>
    %c2 = arith.constant 2 : index
    %c0_25 = arith.constant 0 : index
    %c0_26 = arith.constant 0 : index
    %64 = vector.load %arg2[%c2, %c0_25, %c0_26] : memref<3x2x20xf32, #tpu.memory_space<vmem>>, vector<1x2x20xf32>
    %65 = vector.shape_cast %64 : vector<1x2x20xf32> to vector<2x20xf32>
    %c2_27 = arith.constant 2 : index
    %c0_28 = arith.constant 0 : index
    %c0_29 = arith.constant 0 : index
    %66 = vector.load %arg3[%c2_27, %c0_28, %c0_29] : memref<3x20x2xf32, #tpu.memory_space<vmem>>, vector<1x20x2xf32>
    %67 = vector.shape_cast %66 : vector<1x20x2xf32> to vector<20x2xf32>
    %c2_30 = arith.constant 2 : index
    %c0_31 = arith.constant 0 : index
    %c0_32 = arith.constant 0 : index
    %68 = vector.load %arg4[%c2_30, %c0_31, %c0_32] : memref<3x20x1xf32, #tpu.memory_space<vmem>>, vector<1x20x1xf32>
    %69 = vector.shape_cast %68 : vector<1x20x1xf32> to vector<20x1xf32>
    %c2_33 = arith.constant 2 : index
    %c0_34 = arith.constant 0 : index
    %c0_35 = arith.constant 0 : index
    %70 = vector.load %arg5[%c2_33, %c0_34, %c0_35] : memref<3x20x1xf32, #tpu.memory_space<vmem>>, vector<1x20x1xf32>
    %71 = vector.shape_cast %70 : vector<1x20x1xf32> to vector<20x1xf32>
    %72 = vector.extract_strided_slice %67 {offsets = [0, 0], sizes = [20, 1], strides = [1, 1]} : vector<20x2xf32> to vector<20x1xf32>
    %73 = vector.extract_strided_slice %63 {offsets = [0, 0], sizes = [1, 128], strides = [1, 1]} : vector<2x128xf32> to vector<1x128xf32>
    %74 = vector.broadcast %72 : vector<20x1xf32> to vector<20x128xf32>
    %75 = vector.broadcast %73 : vector<1x128xf32> to vector<20x128xf32>
    %76 = arith.mulf %74, %75 : vector<20x128xf32>
    %77 = vector.broadcast %71 : vector<20x1xf32> to vector<20x128xf32>
    %78 = arith.addf %77, %76 : vector<20x128xf32>
    %79 = vector.extract_strided_slice %67 {offsets = [0, 1], sizes = [20, 1], strides = [1, 1]} : vector<20x2xf32> to vector<20x1xf32>
    %80 = vector.extract_strided_slice %63 {offsets = [1, 0], sizes = [1, 128], strides = [1, 1]} : vector<2x128xf32> to vector<1x128xf32>
    %81 = vector.broadcast %79 : vector<20x1xf32> to vector<20x128xf32>
    %82 = vector.broadcast %80 : vector<1x128xf32> to vector<20x128xf32>
    %83 = arith.mulf %81, %82 : vector<20x128xf32>
    %84 = arith.addf %78, %83 : vector<20x128xf32>
    %85 = math.tanh %84 : vector<20x128xf32>
    %86 = vector.broadcast %69 : vector<20x1xf32> to vector<20x128xf32>
    %87 = arith.mulf %86, %85 : vector<20x128xf32>
    %88 = vector.broadcast %69 : vector<20x1xf32> to vector<20x128xf32>
    %89 = arith.addf %87, %88 : vector<20x128xf32>
    %cst_36 = arith.constant dense<0.000000e+00> : vector<2x128xf32>
    %90 = tpu.matmul %65, %89, %cst_36 {dimension_numbers = #tpu.dot_dimension_numbers<[1], [0], [0], [1], [0, 0, 1, 1], [], []>} : vector<2x20xf32>, vector<20x128xf32>, vector<2x128xf32> -> vector<2x128xf32>
    %91 = vector.broadcast %3 : vector<1x128xf32> to vector<2x128xf32>
    %92 = arith.mulf %90, %91 : vector<2x128xf32>
    %93 = arith.addf %33, %92 : vector<2x128xf32>
    %94 = tpu.concatenate %93, %63 in 0 : vector<2x128xf32>, vector<2x128xf32> -> vector<4x128xf32>
    %c0_37 = arith.constant 0 : index
    %c0_38 = arith.constant 0 : index
    %95 = vector.load %arg6[%c0_37, %c0_38] : memref<4x128xf32, #tpu.memory_space<vmem>>, vector<4x128xf32>
    tpu.vector_store %arg6[%c0_37, %c0_38], %94 {strides = array<i32>} : memref<4x128xf32, #tpu.memory_space<vmem>>, vector<4x128xf32>,
    return
  }
  func.func @transform_0(%arg0: i32) -> (i32, i32) {
    %c0_i32 = arith.constant 0 : i32
    %c0_i32_0 = arith.constant 0 : i32
    return %c0_i32, %arg0 : i32, i32
  }
  func.func @transform_1(%arg0: i32) -> (i32, i32, i32) {
    %c0_i32 = arith.constant 0 : i32
    %c0_i32_0 = arith.constant 0 : i32
    %c0_i32_1 = arith.constant 0 : i32
    %c0_i32_2 = arith.constant 0 : i32
    return %c0_i32, %c0_i32_0, %c0_i32_1 : i32, i32, i32
  }
  func.func @transform_2(%arg0: i32) -> (i32, i32, i32) {
    %c0_i32 = arith.constant 0 : i32
    %c0_i32_0 = arith.constant 0 : i32
    %c0_i32_1 = arith.constant 0 : i32
    %c0_i32_2 = arith.constant 0 : i32
    return %c0_i32, %c0_i32_0, %c0_i32_1 : i32, i32, i32
  }
  func.func @transform_3(%arg0: i32) -> (i32, i32, i32) {
    %c0_i32 = arith.constant 0 : i32
    %c0_i32_0 = arith.constant 0 : i32
    %c0_i32_1 = arith.constant 0 : i32
    %c0_i32_2 = arith.constant 0 : i32
    return %c0_i32, %c0_i32_0, %c0_i32_1 : i32, i32, i32
  }
  func.func @transform_4(%arg0: i32) -> (i32, i32, i32) {
    %c0_i32 = arith.constant 0 : i32
    %c0_i32_0 = arith.constant 0 : i32
    %c0_i32_1 = arith.constant 0 : i32
    %c0_i32_2 = arith.constant 0 : i32
    return %c0_i32, %c0_i32_0, %c0_i32_1 : i32, i32, i32
  }
  func.func @transform_5(%arg0: i32) -> (i32, i32) {
    %c0_i32 = arith.constant 0 : i32
    %c0_i32_0 = arith.constant 0 : i32
    return %c0_i32, %arg0 : i32, i32
  }
}

</mosaic_0001>

<llo_original>
// kernel: tpu_custom_call.1
$region0: #{tpu_custom_call.1}
  #allocation0 [shape = 'u32[]', space=smem, size = 0x4, offset = 0x4, fixed_abs, tag = 'smem constant byte address 0x4 - core index']
  #allocation1 [shape = 'u32[72,128]{1,0:T(1,128)}', space=vmem, size = 0x9000, scoped, tag = 'internal scratch']
  %s0 = inlined_call_operand.vmem [shape: f32[5,128], index: 0, kind: input, shape index: {}]
  %s1 = inlined_call_operand.vmem [shape: f32[3,2,20], index: 1, kind: input, shape index: {}]
  %s2 = inlined_call_operand.vmem [shape: f32[3,20,2], index: 2, kind: input, shape index: {}]
  %s3 = inlined_call_operand.vmem [shape: f32[3,20,1], index: 3, kind: input, shape index: {}]
  %s4 = inlined_call_operand.vmem [shape: f32[3,20,1], index: 4, kind: input, shape index: {}]
  %s5 = inlined_call_operand.hbm [shape: f32[4,128], index: 5, kind: output, shape index: {}]
  %s6 = sld [smem:[#allocation0]]
  $region30: #{tpu_custom_call.1} parent=0
    _
  %s8 = ssub.s32 1, %s6
  %s9 = scalar_select 0, %s8, %s6
  $region1: #{tpu_custom_call.1} parent=0
    #allocation2 [shape = 'u8[2048]{0}', space=vmem, size = 0x800, scoped, tag = 'output window, operand 0, single buffered']
    #allocation3 [shape = 's32[1]{0}', space=sflag, size = 0x4, scoped, tag = 'scoped memory for tpu_custom_call.1']
    %10 = vsyncpa [#allocation3], 0
    // Predicated region
    $region2: #{tpu_custom_call.1} parent=1 // pred_check
      _
    $region3: #{tpu_custom_call.1} parent=1 // pred_check_branch
      %12 = sbr.rel (0) target = $region5
    $region4: #{tpu_custom_call.1} parent=1 // pred_region
      _
    $region5: #{tpu_custom_call.1} parent=1 // pred_fallthru
      _
    // Predicated region
    $region6: #{tpu_custom_call.1} parent=1 // pred_check
      _
    $region7: #{tpu_custom_call.1} parent=1 // pred_check_branch
      %14 = sbr.rel (0) target = $region9
    $region8: #{tpu_custom_call.1} parent=1 // pred_region
      _
    $region9: #{tpu_custom_call.1} parent=1 // pred_fallthru
      _
    // Predicated region
    $region10: #{tpu_custom_call.1} parent=1 // pred_check
      _
    $region11: #{tpu_custom_call.1} parent=1 // pred_check_branch
      %16 = sbr.rel (0) target = $region13
    $region12: #{tpu_custom_call.1} parent=1 // pred_region
      _
    $region13: #{tpu_custom_call.1} parent=1 // pred_fallthru
      _
    // Predicated region
    $region14: #{tpu_custom_call.1} parent=1 // pred_check
      _
    $region15: #{tpu_custom_call.1} parent=1 // pred_check_branch
      %18 = sbr.rel (0) target = $region17
    $region16: #{tpu_custom_call.1} parent=1 // pred_region
      _
    $region17: #{tpu_custom_call.1} parent=1 // pred_fallthru
      _
    // Predicated region
    $region18: #{tpu_custom_call.1} parent=1 // pred_check
      _
    $region19: #{tpu_custom_call.1} parent=1 // pred_check_branch
      %20 = sbr.rel (0) target = $region21
    $region20: #{tpu_custom_call.1} parent=1 // pred_region
      _
    $region21: #{tpu_custom_call.1} parent=1 // pred_fallthru
      _
    %v21 = vld [vmem:[%s0] sm:$0x1f]
    %v22 = vld [vmem:[%s1] sm:$0x3]
    %v23 = vld [vmem:[%s2] sm:$0xff]
    %v24 = vld [vmem:[%s2 + $0x8] sm:$0xff]
    %v25 = vld [vmem:[%s2 + $0x10] sm:$0xf]
    %v26 = vld [vmem:[%s3] sm:$0xff]
    %v27 = vld [vmem:[%s3 + $0x8] sm:$0xff]
    %v28 = vld [vmem:[%s3 + $0x10] sm:$0xf]
    %v29 = vld [vmem:[%s4] sm:$0xff]
    %v30 = vld [vmem:[%s4 + $0x8] sm:$0xff]
    %v31 = vld [vmem:[%s4 + $0x10] sm:$0xf]
    %33 = vset.pattern.permute.xlu0 0
    %34 = vperm.xlu0 %33, %v23
    %v35 = vpop.permute.xlu0 %34
    %38 = vset.pattern.permute.xlu0 0
    %39 = vperm.xlu0 %38, %v24
    %v40 = vpop.permute.xlu0 %39
    %43 = vset.pattern.permute.xlu0 0
    %44 = vperm.xlu0 %43, %v25
    %v45 = vpop.permute.xlu0 %44
    %v47 = vperm.slane %v21, 2
    %v48 = vmul.f32 %v35, %v47
    %v49 = vmul.f32 %v40, %v47
    %v50 = vmul.f32 %v45, %v47
    %52 = vset.pattern.permute.xlu0 0
    %53 = vperm.xlu0 %52, %v29
    %v54 = vpop.permute.xlu0 %53
    %57 = vset.pattern.permute.xlu0 0
    %58 = vperm.xlu0 %57, %v30
    %v59 = vpop.permute.xlu0 %58
    %62 = vset.pattern.permute.xlu0 0
    %63 = vperm.xlu0 %62, %v31
    %v64 = vpop.permute.xlu0 %63
    %v66 = vadd.f32 %v54, %v48
    %v67 = vadd.f32 %v59, %v49
    %v68 = vadd.f32 %v64, %v50
    %69 = vset.pattern.permute.xlu0 1
    %70 = vperm.xlu0 %69, %v23
    %v71 = vpop.permute.xlu0 %70
    %73 = vset.pattern.permute.xlu0 1
    %74 = vperm.xlu0 %73, %v24
    %v75 = vpop.permute.xlu0 %74
    %77 = vset.pattern.permute.xlu0 1
    %78 = vperm.xlu0 %77, %v25
    %v79 = vpop.permute.xlu0 %78
    %v81 = vperm.slane %v21, 3
    %v82 = vmul.f32 %v71, %v81
    %v83 = vmul.f32 %v75, %v81
    %v84 = vmul.f32 %v79, %v81
    %v85 = vadd.f32 %v66, %v82
    %v86 = vadd.f32 %v67, %v83
    %v87 = vadd.f32 %v68, %v84
    %v88 = vtanh.pop %v85
    %v89 = vtanh.pop %v86
    %v90 = vtanh.pop %v87
    %92 = vset.pattern.permute.xlu0 0
    %93 = vperm.xlu0 %92, %v26
    %v94 = vpop.permute.xlu0 %93
    %97 = vset.pattern.permute.xlu0 0
    %98 = vperm.xlu0 %97, %v27
    %v99 = vpop.permute.xlu0 %98
    %102 = vset.pattern.permute.xlu0 0
    %103 = vperm.xlu0 %102, %v28
    %v104 = vpop.permute.xlu0 %103
    %v106 = vmul.f32 %v94, %v88
    %v107 = vmul.f32 %v99, %v89
    %v108 = vmul.f32 %v104, %v90
    %v109 = vadd.f32 %v106, %v94
    %v110 = vadd.f32 %v107, %v99
    %v111 = vadd.f32 %v108, %v104
    %vm112 = vcmask 162816
    %v114 = vsel %vm112, %v22, 0
    %vm116 = vcmask 1043456
    %v118 = vsel %vm116, %v111, 0
    %120 = vmatpush.msra.mxu0 0.0
    %121 = vmatpush.msra.mxu0 0.0
    %122 = vmatpush.msra.mxu0 0.0
    %123 = vmatpush.msra.mxu0 0.0
    %124 = vmatpush.msra.mxu0 0.0
    %125 = vmatpush.msra.mxu0 0.0
    %126 = vmatpush.msra.mxu0 0.0
    %127 = vmatpush.msra.mxu0 0.0
    %128 = vmatpush.msra.mxu0 0.0
    %129 = vmatpush.msra.mxu0 0.0
    %130 = vmatpush.msra.mxu0 0.0
    %131 = vmatpush.msra.mxu0 0.0
    %132 = vmatpush.msra.mxu0 0.0
    %133 = vmatpush.msra.mxu0 %v118
    %134 = vmatpush.msra.mxu0 %v110
    %135 = vmatpush.msra.mxu0 %v109
    %136 = vmatmul.f32.gmra.mxu0 %v114
    %v137 = vpop.f32.mrf.mxu0
    %v138 = vadd.f32 0.0, %v137
    %139 = vdwg.mxu0
    %v140 = vperm.slane %v21, 4
    %v141 = vmul.f32 %v138, %v140
    %v142 = vadd.f32 %v21, %v141
    %s143 = scalar_lea.vmem %s1, 2
    %v144 = vld [vmem:[%s143] sm:$0x3]
    %s145 = scalar_lea.vmem %s2, 24
    %v146 = vld [vmem:[%s145] sm:$0xff]
    %v147 = vld [vmem:[%s145 + $0x8] sm:$0xff]
    %v148 = vld [vmem:[%s145 + $0x10] sm:$0xf]
    %s149 = scalar_lea.vmem %s3, 24
    %v150 = vld [vmem:[%s149] sm:$0xff]
    %v151 = vld [vmem:[%s149 + $0x8] sm:$0xff]
    %v152 = vld [vmem:[%s149 + $0x10] sm:$0xf]
    %s153 = scalar_lea.vmem %s4, 24
    %v154 = vld [vmem:[%s153] sm:$0xff]
    %v155 = vld [vmem:[%s153 + $0x8] sm:$0xff]
    %v156 = vld [vmem:[%s153 + $0x10] sm:$0xf]
    %158 = vset.pattern.permute.xlu0 0
    %159 = vperm.xlu0 %158, %v146
    %v160 = vpop.permute.xlu0 %159
    %163 = vset.pattern.permute.xlu0 0
    %164 = vperm.xlu0 %163, %v147
    %v165 = vpop.permute.xlu0 %164
    %168 = vset.pattern.permute.xlu0 0
    %169 = vperm.xlu0 %168, %v148
    %v170 = vpop.permute.xlu0 %169
    %v172 = vperm.slane %v142, 0
    %v173 = vmul.f32 %v160, %v172
    %v174 = vmul.f32 %v165, %v172
    %v175 = vmul.f32 %v170, %v172
    %177 = vset.pattern.permute.xlu0 0
    %178 = vperm.xlu0 %177, %v154
    %v179 = vpop.permute.xlu0 %178
    %182 = vset.pattern.permute.xlu0 0
    %183 = vperm.xlu0 %182, %v155
    %v184 = vpop.permute.xlu0 %183
    %187 = vset.pattern.permute.xlu0 0
    %188 = vperm.xlu0 %187, %v156
    %v189 = vpop.permute.xlu0 %188
    %v191 = vadd.f32 %v179, %v173
    %v192 = vadd.f32 %v184, %v174
    %v193 = vadd.f32 %v189, %v175
    %194 = vset.pattern.permute.xlu0 1
    %195 = vperm.xlu0 %194, %v146
    %v196 = vpop.permute.xlu0 %195
    %198 = vset.pattern.permute.xlu0 1
    %199 = vperm.xlu0 %198, %v147
    %v200 = vpop.permute.xlu0 %199
    %202 = vset.pattern.permute.xlu0 1
    %203 = vperm.xlu0 %202, %v148
    %v204 = vpop.permute.xlu0 %203
    %v206 = vperm.slane %v142, 1
    %v207 = vmul.f32 %v196, %v206
    %v208 = vmul.f32 %v200, %v206
    %v209 = vmul.f32 %v204, %v206
    %v210 = vadd.f32 %v191, %v207
    %v211 = vadd.f32 %v192, %v208
    %v212 = vadd.f32 %v193, %v209
    %v213 = vtanh.pop %v210
    %v214 = vtanh.pop %v211
    %v215 = vtanh.pop %v212
    %217 = vset.pattern.permute.xlu0 0
    %218 = vperm.xlu0 %217, %v150
    %v219 = vpop.permute.xlu0 %218
    %222 = vset.pattern.permute.xlu0 0
    %223 = vperm.xlu0 %222, %v151
    %v224 = vpop.permute.xlu0 %223
    %227 = vset.pattern.permute.xlu0 0
    %228 = vperm.xlu0 %227, %v152
    %v229 = vpop.permute.xlu0 %228
    %v231 = vmul.f32 %v219, %v213
    %v232 = vmul.f32 %v224, %v214
    %v233 = vmul.f32 %v229, %v215
    %v234 = vadd.f32 %v231, %v219
    %v235 = vadd.f32 %v232, %v224
    %v236 = vadd.f32 %v233, %v229
    %v238 = vsel %vm112, %v144, 0
    %v241 = vsel %vm116, %v236, 0
    %243 = vmatpush.msra.mxu0 0.0
    %244 = vmatpush.msra.mxu0 0.0
    %245 = vmatpush.msra.mxu0 0.0
    %246 = vmatpush.msra.mxu0 0.0
    %247 = vmatpush.msra.mxu0 0.0
    %248 = vmatpush.msra.mxu0 0.0
    %249 = vmatpush.msra.mxu0 0.0
    %250 = vmatpush.msra.mxu0 0.0
    %251 = vmatpush.msra.mxu0 0.0
    %252 = vmatpush.msra.mxu0 0.0
    %253 = vmatpush.msra.mxu0 0.0
    %254 = vmatpush.msra.mxu0 0.0
    %255 = vmatpush.msra.mxu0 0.0
    %256 = vmatpush.msra.mxu0 %v241
    %257 = vmatpush.msra.mxu0 %v235
    %258 = vmatpush.msra.mxu0 %v234
    %259 = vmatmul.f32.gmra.mxu0 %v238
    %v260 = vpop.f32.mrf.mxu0
    %v261 = vadd.f32 0.0, %v260
    %262 = vdwg.mxu0
    %v263 = vmul.f32 %v261, %v140
    %v265 = vrot.slane %v263, 6
    %v267 = vadd.f32 %v21, %v265
    %s268 = scalar_lea.vmem %s1, 4
    %v269 = vld [vmem:[%s268] sm:$0x3]
    %s270 = scalar_lea.vmem %s2, 48
    %v271 = vld [vmem:[%s270] sm:$0xff]
    %v272 = vld [vmem:[%s270 + $0x8] sm:$0xff]
    %v273 = vld [vmem:[%s270 + $0x10] sm:$0xf]
    %s274 = scalar_lea.vmem %s3, 48
    %v275 = vld [vmem:[%s274] sm:$0xff]
    %v276 = vld [vmem:[%s274 + $0x8] sm:$0xff]
    %v277 = vld [vmem:[%s274 + $0x10] sm:$0xf]
    %s278 = scalar_lea.vmem %s4, 48
    %v279 = vld [vmem:[%s278] sm:$0xff]
    %v280 = vld [vmem:[%s278 + $0x8] sm:$0xff]
    %v281 = vld [vmem:[%s278 + $0x10] sm:$0xf]
    %283 = vset.pattern.permute.xlu0 0
    %284 = vperm.xlu0 %283, %v271
    %v285 = vpop.permute.xlu0 %284
    %288 = vset.pattern.permute.xlu0 0
    %289 = vperm.xlu0 %288, %v272
    %v290 = vpop.permute.xlu0 %289
    %293 = vset.pattern.permute.xlu0 0
    %294 = vperm.xlu0 %293, %v273
    %v295 = vpop.permute.xlu0 %294
    %v297 = vperm.slane %v267, 2
    %v298 = vmul.f32 %v285, %v297
    %v299 = vmul.f32 %v290, %v297
    %v300 = vmul.f32 %v295, %v297
    %302 = vset.pattern.permute.xlu0 0
    %303 = vperm.xlu0 %302, %v279
    %v304 = vpop.permute.xlu0 %303
    %307 = vset.pattern.permute.xlu0 0
    %308 = vperm.xlu0 %307, %v280
    %v309 = vpop.permute.xlu0 %308
    %312 = vset.pattern.permute.xlu0 0
    %313 = vperm.xlu0 %312, %v281
    %v314 = vpop.permute.xlu0 %313
    %v316 = vadd.f32 %v304, %v298
    %v317 = vadd.f32 %v309, %v299
    %v318 = vadd.f32 %v314, %v300
    %319 = vset.pattern.permute.xlu0 1
    %320 = vperm.xlu0 %319, %v271
    %v321 = vpop.permute.xlu0 %320
    %323 = vset.pattern.permute.xlu0 1
    %324 = vperm.xlu0 %323, %v272
    %v325 = vpop.permute.xlu0 %324
    %327 = vset.pattern.permute.xlu0 1
    %328 = vperm.xlu0 %327, %v273
    %v329 = vpop.permute.xlu0 %328
    %v331 = vperm.slane %v267, 3
    %v332 = vmul.f32 %v321, %v331
    %v333 = vmul.f32 %v325, %v331
    %v334 = vmul.f32 %v329, %v331
    %v335 = vadd.f32 %v316, %v332
    %v336 = vadd.f32 %v317, %v333
    %v337 = vadd.f32 %v318, %v334
    %v338 = vtanh.pop %v335
    %v339 = vtanh.pop %v336
    %v340 = vtanh.pop %v337
    %342 = vset.pattern.permute.xlu0 0
    %343 = vperm.xlu0 %342, %v275
    %v344 = vpop.permute.xlu0 %343
    %347 = vset.pattern.permute.xlu0 0
    %348 = vperm.xlu0 %347, %v276
    %v349 = vpop.permute.xlu0 %348
    %352 = vset.pattern.permute.xlu0 0
    %353 = vperm.xlu0 %352, %v277
    %v354 = vpop.permute.xlu0 %353
    %v356 = vmul.f32 %v344, %v338
    %v357 = vmul.f32 %v349, %v339
    %v358 = vmul.f32 %v354, %v340
    %v359 = vadd.f32 %v356, %v344
    %v360 = vadd.f32 %v357, %v349
    %v361 = vadd.f32 %v358, %v354
    %v363 = vsel %vm112, %v269, 0
    %v366 = vsel %vm116, %v361, 0
    %368 = vmatpush.msra.mxu0 0.0
    %369 = vmatpush.msra.mxu0 0.0
    %370 = vmatpush.msra.mxu0 0.0
    %371 = vmatpush.msra.mxu0 0.0
    %372 = vmatpush.msra.mxu0 0.0
    %373 = vmatpush.msra.mxu0 0.0
    %374 = vmatpush.msra.mxu0 0.0
    %375 = vmatpush.msra.mxu0 0.0
    %376 = vmatpush.msra.mxu0 0.0
    %377 = vmatpush.msra.mxu0 0.0
    %378 = vmatpush.msra.mxu0 0.0
    %379 = vmatpush.msra.mxu0 0.0
    %380 = vmatpush.msra.mxu0 0.0
    %381 = vmatpush.msra.mxu0 %v366
    %382 = vmatpush.msra.mxu0 %v360
    %383 = vmatpush.msra.mxu0 %v359
    %384 = vmatmul.f32.gmra.mxu0 %v363
    %v385 = vpop.f32.mrf.mxu0
    %v386 = vadd.f32 0.0, %v385
    %387 = vdwg.mxu0
    %v388 = vmul.f32 %v386, %v140
    %v389 = vadd.f32 %v142, %v388
    %vm390 = vcmask 1041408
    %v391 = vsel %vm390, %v389, %v267
    %392 = vst [vmem:[#allocation2] sm:$0xf] %v391
    // Predicated region
    $region22: #{tpu_custom_call.1} parent=1 // pred_check
      _
    $region23: #{tpu_custom_call.1} parent=1 // pred_check_branch
      %394 = sbr.rel (0) target = $region25
    $region24: #{tpu_custom_call.1} parent=1 // pred_region
      %396 = vsyncadd [#allocation3], 0
      %s398 = sshll.u32 [#allocation2], 4
      %s399 = int_to_ptr.vmem [resolvable:$true] %s398
      %s400 = sshll.u32 %s5, 4
      %s401 = int_to_ptr.hbm [resolvable:$true] %s400
      %403 = dma.vmem_to_hbm [thread:$0]  %s399, 64, %s401, [#allocation3]
    $region25: #{tpu_custom_call.1} parent=1 // pred_fallthru
      _
    // Predicated region
    $region26: #{tpu_custom_call.1} parent=1 // pred_check
      _
    $region27: #{tpu_custom_call.1} parent=1 // pred_check_branch
      %405 = sbr.rel (0) target = $region29
    $region28: #{tpu_custom_call.1} parent=1 // pred_region
      %407 = dma.done [#allocation3], 64
    $region29: #{tpu_custom_call.1} parent=1 // pred_fallthru
      _
    %408 = vsyncpa [#allocation3], 1

</llo_original>
